<compile_context>
chip_gen: v7x
topology: tpu7x:2x2x1
jax: 0.10.0
libtpu: 0.0.40
codegen_flags: <defaults>
</compile_context>

<pallas_src>
import jax
import jax.numpy as jnp
from jax.experimental import pallas as pl
from jax.experimental.pallas import tpu as pltpu


def _weight_norm(v, g):
    # nn.utils.weight_norm (dim=0): w = g * v / ||v||, norm over (in_ch, k) per out-channel.
    norm = jnp.sqrt(jnp.sum(v * v, axis=(1, 2), keepdims=True))
    return v * (g[:, None, None] / norm)


def _make_kernel(block_cfg, kernel_size):
    K = kernel_size

    def kernel(x_ref, *refs):
        out_ref = refs[-1]
        w_refs = refs[:-1]
        pos = [0]

        def nxt():
            r = w_refs[pos[0]]
            pos[0] += 1
            return r[...]

        def shift_right(h, s):
            # y[:, t] = h[:, t - s] for t >= s else 0  (causal left-zero-padded shift)
            if s == 0:
                return h
            rolled = pltpu.roll(h, shift=s, axis=1)              # lane rotation (XLU)
            col = jax.lax.broadcasted_iota(jnp.int32, h.shape, 1)
            return jnp.where(col >= s, rolled, 0.0)

        def causal_conv(h, w_flat, b, d):
            # Stack K causal taps along the channel/sublane axis -> one MXU matmul.
            # stacked[j*Ci + c, t] = h[c, t - (K-1-j)*d]; w_flat[o, j*Ci + c] = W[o, c, j].
            if K == 1:
                stacked = h
            else:
                stacked = jnp.concatenate(
                    [shift_right(h, (K - 1 - j) * d) for j in range(K)], axis=0)
            return jnp.dot(w_flat, stacked, preferred_element_type=jnp.float32) + b

        h = x_ref[...].astype(jnp.float32)                       # (C0, S_pad)
        for cfg in block_cfg:
            d = cfg["dilation"]
            w1 = nxt(); b1 = nxt()
            w2 = nxt(); b2 = nxt()
            # conv1 -> chomp -> relu -> dropout(id) -> conv2 -> chomp -> relu -> dropout(id)
            o = jnp.maximum(causal_conv(h, w1, b1, d), 0.0)
            o = jnp.maximum(causal_conv(o, w2, b2, d), 0.0)
            if cfg["has_downsample"]:
                wd = nxt(); bd = nxt()
                res = jnp.dot(wd, h, preferred_element_type=jnp.float32) + bd
            else:
                res = h
            h = jnp.maximum(o + res, 0.0)                        # (C_out, S_pad)

        wl = nxt()                                               # (C_last, 1)
        bl = nxt()                                               # (1, 1)
        # output_size == 1 -> VPU multiply + sublane reduce (avoid an N=1 MXU matmul)
        out_ref[...] = (jnp.sum(h * wl, axis=0, keepdims=True) + bl).astype(out_ref.dtype)

    return kernel


def _flatten_params(params):
    """Channel-first effective weights in the fixed order the kernel consumes them.

    Conv weights are folded (weight_norm applied) and flattened so that the K taps
    line up with the kernel's stacked-shift layout: w_flat[o, j*Ci + c] = W[o, c, j].
    """
    K = params["kernel_size"]
    flat = []
    block_cfg = []
    for blk in params["blocks"]:
        w1 = _weight_norm(blk["v1"], blk["g1"])                  # (C_out, C_in, K)
        w2 = _weight_norm(blk["v2"], blk["g2"])
        flat.append(jnp.transpose(w1, (0, 2, 1)).reshape(w1.shape[0], -1))  # (C_out, K*C_in)
        flat.append(blk["b1"].reshape(-1, 1))
        flat.append(jnp.transpose(w2, (0, 2, 1)).reshape(w2.shape[0], -1))
        flat.append(blk["b2"].reshape(-1, 1))
        has_ds = blk["wd"] is not None
        if has_ds:
            flat.append(blk["wd"][:, :, 0])                      # (C_out, C_in)
            flat.append(blk["bd"].reshape(-1, 1))
        block_cfg.append(dict(dilation=blk["dilation"], has_downsample=has_ds))
    flat.append(params["wl"].reshape(-1, 1))                     # (C_last, 1)
    flat.append(params["bl"].reshape(1, 1))                      # (1, 1)
    return flat, block_cfg, K


def tcn_forward(params, x, t):
    """x: (B, S) float32, t: (B,) float32 -> (B, S) float32 (TCN.forward, output_size=1)."""
    B, S = x.shape
    x = x.astype(jnp.float32)
    t = t.astype(jnp.float32)

    # x.unsqueeze(-1); t.unsqueeze(1).unsqueeze(2).expand(-1, S, -1); cat; permute(0, 2, 1)
    xt = jnp.concatenate(
        [x[:, :, None], jnp.broadcast_to(t[:, None, None], (B, S, 1))], axis=-1)
    xt = jnp.transpose(xt, (0, 2, 1))                            # (B, C0, S) channels-first

    # Pad time axis to a multiple of 128 lanes.  Causal convs never read to the right,
    # so the padded tail cannot influence the first S outputs -> exact, and all vector
    # loads/stores become unmasked full-lane ops.
    S_pad = max(128, ((S + 127) // 128) * 128)
    if S_pad != S:
        xt = jnp.pad(xt, ((0, 0), (0, 0), (0, S_pad - S)))

    flat, block_cfg, K = _flatten_params(params)
    kernel = _make_kernel(block_cfg, K)

    C0 = xt.shape[1]
    in_specs = [pl.BlockSpec((None, C0, S_pad), lambda b: (b, 0, 0))]
    # Weights/biases: whole-array blocks + constant index_map -> VMEM-resident across the grid.
    in_specs += [pl.BlockSpec(w.shape, lambda b: (0, 0)) for w in flat]
    out_specs = pl.BlockSpec((None, 1, S_pad), lambda b: (b, 0, 0))

    out = pl.pallas_call(
        kernel,
        out_shape=jax.ShapeDtypeStruct((B, 1, S_pad), jnp.float32),
        grid=(B,),
        in_specs=in_specs,
        out_specs=out_specs,
        compiler_params=pltpu.CompilerParams(
            dimension_semantics=("parallel",)),                  # 2 TCs on v7x; no-op otherwise
    )(xt, *flat)
    # TODO(synk): for very long sequences, also tile S with a receptive-field halo
    # (sum_i 2*(K-1)*2^i history columns) instead of one whole-S block per batch.
    return out[:, 0, :S]                                         # .squeeze(-1)


def init_params(key, num_inputs=2, num_channels=(32, 32), kernel_size=2, output_size=1):
    """TCN params. Convs carry weight_norm (v, g); weights ~ N(0, 0.01) per init_weights."""
    assert output_size == 1, "forward() squeezes the last dim; output_size must be 1"
    blocks = []
    keys = jax.random.split(key, len(num_channels) + 1)
    in_ch = num_inputs
    for i, out_ch in enumerate(num_channels):
        k1, k2, k3, k4, k5, k6 = jax.random.split(keys[i], 6)
        v1 = 0.01 * jax.random.normal(k1, (out_ch, in_ch, kernel_size), jnp.float32)
        v2 = 0.01 * jax.random.normal(k2, (out_ch, out_ch, kernel_size), jnp.float32)
        blk = dict(
            v1=v1, g1=jnp.sqrt(jnp.sum(v1 * v1, axis=(1, 2))),
            b1=0.01 * jax.random.normal(k3, (out_ch,), jnp.float32),
            v2=v2, g2=jnp.sqrt(jnp.sum(v2 * v2, axis=(1, 2))),
            b2=0.01 * jax.random.normal(k4, (out_ch,), jnp.float32),
            wd=None, bd=None, dilation=2 ** i,
        )
        if in_ch != out_ch:
            blk["wd"] = 0.01 * jax.random.normal(k5, (out_ch, in_ch, 1), jnp.float32)
            blk["bd"] = 0.01 * jax.random.normal(k6, (out_ch,), jnp.float32)
        blocks.append(blk)
        in_ch = out_ch
    kl1, kl2 = jax.random.split(keys[-1])
    wl = 0.01 * jax.random.normal(kl1, (output_size, in_ch), jnp.float32)
    bl = 0.01 * jax.random.normal(kl2, (output_size,), jnp.float32)
    return dict(blocks=blocks, wl=wl, bl=bl, kernel_size=kernel_size)


def tcn_reference(params, x, t):
    """Pure-JAX reference mirroring the PyTorch TCN.forward exactly (inference mode)."""
    B, S = x.shape
    x = x.astype(jnp.float32)
    t = t.astype(jnp.float32)
    K = params["kernel_size"]
    hi = jax.lax.Precision.HIGHEST

    xt = jnp.concatenate(
        [x[:, :, None], jnp.broadcast_to(t[:, None, None], (B, S, 1))], axis=-1)
    h = jnp.transpose(xt, (0, 2, 1))                             # (B, C, S)

    def conv1d(inp, w, b, dilation, pad):
        o = jax.lax.conv_general_dilated(
            inp, w, window_strides=(1,), padding=[(pad, pad)],
            rhs_dilation=(dilation,), dimension_numbers=("NCH", "OIH", "NCH"),
            precision=hi)
        return o + b[None, :, None]

    for blk in params["blocks"]:
        d = blk["dilation"]
        p = (K - 1) * d
        w1 = _weight_norm(blk["v1"], blk["g1"])
        w2 = _weight_norm(blk["v2"], blk["g2"])
        o = jax.nn.relu(conv1d(h, w1, blk["b1"], d, p)[:, :, :S])   # conv1 + chomp + relu
        o = jax.nn.relu(conv1d(o, w2, blk["b2"], d, p)[:, :, :S])   # conv2 + chomp + relu
        if blk["wd"] is not None:
            res = conv1d(h, blk["wd"], blk["bd"], 1, 0)
        else:
            res = h
        h = jax.nn.relu(o + res)
    y = jnp.einsum("bcs,oc->bso", h, params["wl"], precision=hi) + params["bl"]
    return y[..., 0]


if __name__ == "__main__":
    key = jax.random.PRNGKey(0)
    kp, kx, kt = jax.random.split(key, 3)

    B, S = 2, 16
    NUM_CHANNELS = (32, 32)       # two TemporalBlocks, hidden width 32
    KERNEL_SIZE = 2               # dilations 1, 2 -> causal paddings 1, 2
    params = init_params(kp, num_inputs=2, num_channels=NUM_CHANNELS,
                         kernel_size=KERNEL_SIZE, output_size=1)

    x = jax.random.normal(kx, (B, S), dtype=jnp.float32)
    t = jax.random.randint(kt, (B,), 0, 1000).astype(jnp.float32)

    out = jax.block_until_ready(tcn_forward(params, x, t))
    ref = tcn_reference(params, x, t)

    assert out.shape == (B, S)
    assert jnp.allclose(out, ref, atol=1e-3, rtol=1e-3), float(jnp.max(jnp.abs(out - ref)))
    print("KERNEL_OK")
</pallas_src>

<mosaic_0001>
module attributes {stable_mosaic.version = 11 : i64} {
  func.func @kernel(%arg0: i32, %arg1: memref<1x2x128xf32, #tpu.memory_space<vmem>>, %arg2: memref<32x4xf32, #tpu.memory_space<vmem>>, %arg3: memref<32x1xf32, #tpu.memory_space<vmem>>, %arg4: memref<32x64xf32, #tpu.memory_space<vmem>>, %arg5: memref<32x1xf32, #tpu.memory_space<vmem>>, %arg6: memref<32x2xf32, #tpu.memory_space<vmem>>, %arg7: memref<32x1xf32, #tpu.memory_space<vmem>>, %arg8: memref<32x64xf32, #tpu.memory_space<vmem>>, %arg9: memref<32x1xf32, #tpu.memory_space<vmem>>, %arg10: memref<32x64xf32, #tpu.memory_space<vmem>>, %arg11: memref<32x1xf32, #tpu.memory_space<vmem>>, %arg12: memref<32x1xf32, #tpu.memory_space<vmem>>, %arg13: memref<1x1xf32, #tpu.memory_space<vmem>>, %arg14: memref<1x1x128xf32, #tpu.memory_space<vmem>>) attributes {dimension_semantics = [#tpu.dimension_semantics<parallel>], iteration_bounds = array<i64: 2>, scalar_prefetch = 0 : i64, scratch_operands = 0 : i64, tpu.core_type = #tpu.core_type<tc>, window_params = [{transform_indices = @transform_0, window_bounds = array<i64: 1, 2, 128>}, {pipeline_mode = #tpu.pipeline_mode<synchronous>, transform_indices = @transform_1, window_bounds = array<i64: 32, 4>}, {pipeline_mode = #tpu.pipeline_mode<synchronous>, transform_indices = @transform_2, window_bounds = array<i64: 32, 1>}, {pipeline_mode = #tpu.pipeline_mode<synchronous>, transform_indices = @transform_3, window_bounds = array<i64: 32, 64>}, {pipeline_mode = #tpu.pipeline_mode<synchronous>, transform_indices = @transform_4, window_bounds = array<i64: 32, 1>}, {pipeline_mode = #tpu.pipeline_mode<synchronous>, transform_indices = @transform_5, window_bounds = array<i64: 32, 2>}, {pipeline_mode = #tpu.pipeline_mode<synchronous>, transform_indices = @transform_6, window_bounds = array<i64: 32, 1>}, {pipeline_mode = #tpu.pipeline_mode<synchronous>, transform_indices = @transform_7, window_bounds = array<i64: 32, 64>}, {pipeline_mode = #tpu.pipeline_mode<synchronous>, transform_indices = @transform_8, window_bounds = array<i64: 32, 1>}, {pipeline_mode = #tpu.pipeline_mode<synchronous>, transform_indices = @transform_9, window_bounds = array<i64: 32, 64>}, {pipeline_mode = #tpu.pipeline_mode<synchronous>, transform_indices = @transform_10, window_bounds = array<i64: 32, 1>}, {pipeline_mode = #tpu.pipeline_mode<synchronous>, transform_indices = @transform_11, window_bounds = array<i64: 32, 1>}, {pipeline_mode = #tpu.pipeline_mode<synchronous>, transform_indices = @transform_12, window_bounds = array<i64: 1, 1>}, {transform_indices = @transform_13, window_bounds = array<i64: 1, 1, 128>}]} {
    %c0 = arith.constant 0 : index
    %c0_0 = arith.constant 0 : index
    %c0_1 = arith.constant 0 : index
    %0 = vector.load %arg1[%c0, %c0_0, %c0_1] : memref<1x2x128xf32, #tpu.memory_space<vmem>>, vector<1x2x128xf32>
    %1 = vector.shape_cast %0 : vector<1x2x128xf32> to vector<2x128xf32>
    %c0_2 = arith.constant 0 : index
    %c0_3 = arith.constant 0 : index
    %2 = vector.load %arg2[%c0_2, %c0_3] : memref<32x4xf32, #tpu.memory_space<vmem>>, vector<32x4xf32>
    %c0_4 = arith.constant 0 : index
    %c0_5 = arith.constant 0 : index
    %3 = vector.load %arg3[%c0_4, %c0_5] : memref<32x1xf32, #tpu.memory_space<vmem>>, vector<32x1xf32>
    %c0_6 = arith.constant 0 : index
    %c0_7 = arith.constant 0 : index
    %4 = vector.load %arg4[%c0_6, %c0_7] : memref<32x64xf32, #tpu.memory_space<vmem>>, vector<32x64xf32>
    %c0_8 = arith.constant 0 : index
    %c0_9 = arith.constant 0 : index
    %5 = vector.load %arg5[%c0_8, %c0_9] : memref<32x1xf32, #tpu.memory_space<vmem>>, vector<32x1xf32>
    %c1_i32 = arith.constant 1 : i32
    %6 = tpu.dynamic_rotate %1 by %c1_i32 dim 1 : vector<2x128xf32>, i32 -> vector<2x128xf32>
    %7 = tpu.iota {dimensions = array<i32: 1>} : vector<2x128xi32>
    %c1_i32_10 = arith.constant 1 : i32
    %8 = vector.broadcast %c1_i32_10 : i32 to vector<2x128xi32>
    %9 = arith.cmpi sge, %7, %8 : vector<2x128xi32>
    %cst = arith.constant 0.000000e+00 : f32
    %10 = vector.broadcast %cst : f32 to vector<2x128xf32>
    %11 = arith.select %9, %6, %10 : vector<2x128xi1>, vector<2x128xf32>
    %12 = tpu.concatenate %11, %1 in 0 : vector<2x128xf32>, vector<2x128xf32> -> vector<4x128xf32>
    %cst_11 = arith.constant dense<0.000000e+00> : vector<32x128xf32>
    %13 = tpu.matmul %2, %12, %cst_11 {dimension_numbers = #tpu.dot_dimension_numbers<[1], [0], [0], [1], [0, 0, 1, 1], [], []>} : vector<32x4xf32>, vector<4x128xf32>, vector<32x128xf32> -> vector<32x128xf32>
    %14 = vector.broadcast %3 : vector<32x1xf32> to vector<32x128xf32>
    %15 = arith.addf %13, %14 : vector<32x128xf32>
    %cst_12 = arith.constant 0.000000e+00 : f32
    %16 = vector.broadcast %cst_12 : f32 to vector<32x128xf32>
    %17 = arith.maximumf %15, %16 : vector<32x128xf32>
    %c1_i32_13 = arith.constant 1 : i32
    %18 = tpu.dynamic_rotate %17 by %c1_i32_13 dim 1 : vector<32x128xf32>, i32 -> vector<32x128xf32>
    %19 = tpu.iota {dimensions = array<i32: 1>} : vector<32x128xi32>
    %c1_i32_14 = arith.constant 1 : i32
    %20 = vector.broadcast %c1_i32_14 : i32 to vector<32x128xi32>
    %21 = arith.cmpi sge, %19, %20 : vector<32x128xi32>
    %cst_15 = arith.constant 0.000000e+00 : f32
    %22 = vector.broadcast %cst_15 : f32 to vector<32x128xf32>
    %23 = arith.select %21, %18, %22 : vector<32x128xi1>, vector<32x128xf32>
    %24 = tpu.concatenate %23, %17 in 0 : vector<32x128xf32>, vector<32x128xf32> -> vector<64x128xf32>
    %cst_16 = arith.constant dense<0.000000e+00> : vector<32x128xf32>
    %25 = tpu.matmul %4, %24, %cst_16 {dimension_numbers = #tpu.dot_dimension_numbers<[1], [0], [0], [1], [0, 0, 1, 1], [], []>} : vector<32x64xf32>, vector<64x128xf32>, vector<32x128xf32> -> vector<32x128xf32>
    %26 = vector.broadcast %5 : vector<32x1xf32> to vector<32x128xf32>
    %27 = arith.addf %25, %26 : vector<32x128xf32>
    %cst_17 = arith.constant 0.000000e+00 : f32
    %28 = vector.broadcast %cst_17 : f32 to vector<32x128xf32>
    %29 = arith.maximumf %27, %28 : vector<32x128xf32>
    %c0_18 = arith.constant 0 : index
    %c0_19 = arith.constant 0 : index
    %30 = vector.load %arg6[%c0_18, %c0_19] : memref<32x2xf32, #tpu.memory_space<vmem>>, vector<32x2xf32>
    %c0_20 = arith.constant 0 : index
    %c0_21 = arith.constant 0 : index
    %31 = vector.load %arg7[%c0_20, %c0_21] : memref<32x1xf32, #tpu.memory_space<vmem>>, vector<32x1xf32>
    %cst_22 = arith.constant dense<0.000000e+00> : vector<32x128xf32>
    %32 = tpu.matmul %30, %1, %cst_22 {dimension_numbers = #tpu.dot_dimension_numbers<[1], [0], [0], [1], [0, 0, 1, 1], [], []>} : vector<32x2xf32>, vector<2x128xf32>, vector<32x128xf32> -> vector<32x128xf32>
    %33 = vector.broadcast %31 : vector<32x1xf32> to vector<32x128xf32>
    %34 = arith.addf %32, %33 : vector<32x128xf32>
    %35 = arith.addf %29, %34 : vector<32x128xf32>
    %cst_23 = arith.constant 0.000000e+00 : f32
    %36 = vector.broadcast %cst_23 : f32 to vector<32x128xf32>
    %37 = arith.maximumf %35, %36 : vector<32x128xf32>
    %c0_24 = arith.constant 0 : index
    %c0_25 = arith.constant 0 : index
    %38 = vector.load %arg8[%c0_24, %c0_25] : memref<32x64xf32, #tpu.memory_space<vmem>>, vector<32x64xf32>
    %c0_26 = arith.constant 0 : index
    %c0_27 = arith.constant 0 : index
    %39 = vector.load %arg9[%c0_26, %c0_27] : memref<32x1xf32, #tpu.memory_space<vmem>>, vector<32x1xf32>
    %c0_28 = arith.constant 0 : index
    %c0_29 = arith.constant 0 : index
    %40 = vector.load %arg10[%c0_28, %c0_29] : memref<32x64xf32, #tpu.memory_space<vmem>>, vector<32x64xf32>
    %c0_30 = arith.constant 0 : index
    %c0_31 = arith.constant 0 : index
    %41 = vector.load %arg11[%c0_30, %c0_31] : memref<32x1xf32, #tpu.memory_space<vmem>>, vector<32x1xf32>
    %c2_i32 = arith.constant 2 : i32
    %42 = tpu.dynamic_rotate %37 by %c2_i32 dim 1 : vector<32x128xf32>, i32 -> vector<32x128xf32>
    %43 = tpu.iota {dimensions = array<i32: 1>} : vector<32x128xi32>
    %c2_i32_32 = arith.constant 2 : i32
    %44 = vector.broadcast %c2_i32_32 : i32 to vector<32x128xi32>
    %45 = arith.cmpi sge, %43, %44 : vector<32x128xi32>
    %cst_33 = arith.constant 0.000000e+00 : f32
    %46 = vector.broadcast %cst_33 : f32 to vector<32x128xf32>
    %47 = arith.select %45, %42, %46 : vector<32x128xi1>, vector<32x128xf32>
    %48 = tpu.concatenate %47, %37 in 0 : vector<32x128xf32>, vector<32x128xf32> -> vector<64x128xf32>
    %cst_34 = arith.constant dense<0.000000e+00> : vector<32x128xf32>
    %49 = tpu.matmul %38, %48, %cst_34 {dimension_numbers = #tpu.dot_dimension_numbers<[1], [0], [0], [1], [0, 0, 1, 1], [], []>} : vector<32x64xf32>, vector<64x128xf32>, vector<32x128xf32> -> vector<32x128xf32>
    %50 = vector.broadcast %39 : vector<32x1xf32> to vector<32x128xf32>
    %51 = arith.addf %49, %50 : vector<32x128xf32>
    %cst_35 = arith.constant 0.000000e+00 : f32
    %52 = vector.broadcast %cst_35 : f32 to vector<32x128xf32>
    %53 = arith.maximumf %51, %52 : vector<32x128xf32>
    %c2_i32_36 = arith.constant 2 : i32
    %54 = tpu.dynamic_rotate %53 by %c2_i32_36 dim 1 : vector<32x128xf32>, i32 -> vector<32x128xf32>
    %55 = tpu.iota {dimensions = array<i32: 1>} : vector<32x128xi32>
    %c2_i32_37 = arith.constant 2 : i32
    %56 = vector.broadcast %c2_i32_37 : i32 to vector<32x128xi32>
    %57 = arith.cmpi sge, %55, %56 : vector<32x128xi32>
    %cst_38 = arith.constant 0.000000e+00 : f32
    %58 = vector.broadcast %cst_38 : f32 to vector<32x128xf32>
    %59 = arith.select %57, %54, %58 : vector<32x128xi1>, vector<32x128xf32>
    %60 = tpu.concatenate %59, %53 in 0 : vector<32x128xf32>, vector<32x128xf32> -> vector<64x128xf32>
    %cst_39 = arith.constant dense<0.000000e+00> : vector<32x128xf32>
    %61 = tpu.matmul %40, %60, %cst_39 {dimension_numbers = #tpu.dot_dimension_numbers<[1], [0], [0], [1], [0, 0, 1, 1], [], []>} : vector<32x64xf32>, vector<64x128xf32>, vector<32x128xf32> -> vector<32x128xf32>
    %62 = vector.broadcast %41 : vector<32x1xf32> to vector<32x128xf32>
    %63 = arith.addf %61, %62 : vector<32x128xf32>
    %cst_40 = arith.constant 0.000000e+00 : f32
    %64 = vector.broadcast %cst_40 : f32 to vector<32x128xf32>
    %65 = arith.maximumf %63, %64 : vector<32x128xf32>
    %66 = arith.addf %65, %37 : vector<32x128xf32>
    %cst_41 = arith.constant 0.000000e+00 : f32
    %67 = vector.broadcast %cst_41 : f32 to vector<32x128xf32>
    %68 = arith.maximumf %66, %67 : vector<32x128xf32>
    %c0_42 = arith.constant 0 : index
    %c0_43 = arith.constant 0 : index
    %69 = vector.load %arg12[%c0_42, %c0_43] : memref<32x1xf32, #tpu.memory_space<vmem>>, vector<32x1xf32>
    %c0_44 = arith.constant 0 : index
    %c0_45 = arith.constant 0 : index
    %70 = vector.load %arg13[%c0_44, %c0_45] : memref<1x1xf32, #tpu.memory_space<vmem>>, vector<1x1xf32>
    %71 = vector.broadcast %69 : vector<32x1xf32> to vector<32x128xf32>
    %72 = arith.mulf %68, %71 : vector<32x128xf32>
    %cst_46 = arith.constant dense<0.000000e+00> : vector<128xf32>
    %73 = vector.multi_reduction <add>, %72, %cst_46 [0] : vector<32x128xf32> to vector<128xf32>
    %74 = vector.shape_cast %73 : vector<128xf32> to vector<1x128xf32>
    %75 = vector.broadcast %70 : vector<1x1xf32> to vector<1x128xf32>
    %76 = arith.addf %74, %75 : vector<1x128xf32>
    %c0_47 = arith.constant 0 : index
    %c0_48 = arith.constant 0 : index
    %c0_49 = arith.constant 0 : index
    %77 = vector.load %arg14[%c0_47, %c0_48, %c0_49] : memref<1x1x128xf32, #tpu.memory_space<vmem>>, vector<1x1x128xf32>
    %78 = vector.shape_cast %77 : vector<1x1x128xf32> to vector<1x128xf32>
    %79 = vector.shape_cast %76 : vector<1x128xf32> to vector<1x1x128xf32>
    tpu.vector_store %arg14[%c0_47, %c0_48, %c0_49], %79 {strides = array<i32>} : memref<1x1x128xf32, #tpu.memory_space<vmem>>, vector<1x1x128xf32>,
    return
  }
  func.func @transform_0(%arg0: i32) -> (i32, i32, i32) {
    %c0_i32 = arith.constant 0 : i32
    %c0_i32_0 = arith.constant 0 : i32
    %c0_i32_1 = arith.constant 0 : i32
    return %arg0, %c0_i32, %c0_i32_0 : i32, i32, i32
  }
  func.func @transform_1(%arg0: i32) -> (i32, i32) {
    %c0_i32 = arith.constant 0 : i32
    %c0_i32_0 = arith.constant 0 : i32
    %c0_i32_1 = arith.constant 0 : i32
    return %c0_i32, %c0_i32_0 : i32, i32
  }
  func.func @transform_2(%arg0: i32) -> (i32, i32) {
    %c0_i32 = arith.constant 0 : i32
    %c0_i32_0 = arith.constant 0 : i32
    %c0_i32_1 = arith.constant 0 : i32
    return %c0_i32, %c0_i32_0 : i32, i32
  }
  func.func @transform_3(%arg0: i32) -> (i32, i32) {
    %c0_i32 = arith.constant 0 : i32
    %c0_i32_0 = arith.constant 0 : i32
    %c0_i32_1 = arith.constant 0 : i32
    return %c0_i32, %c0_i32_0 : i32, i32
  }
  func.func @transform_4(%arg0: i32) -> (i32, i32) {
    %c0_i32 = arith.constant 0 : i32
    %c0_i32_0 = arith.constant 0 : i32
    %c0_i32_1 = arith.constant 0 : i32
    return %c0_i32, %c0_i32_0 : i32, i32
  }
  func.func @transform_5(%arg0: i32) -> (i32, i32) {
    %c0_i32 = arith.constant 0 : i32
    %c0_i32_0 = arith.constant 0 : i32
    %c0_i32_1 = arith.constant 0 : i32
    return %c0_i32, %c0_i32_0 : i32, i32
  }
  func.func @transform_6(%arg0: i32) -> (i32, i32) {
    %c0_i32 = arith.constant 0 : i32
    %c0_i32_0 = arith.constant 0 : i32
    %c0_i32_1 = arith.constant 0 : i32
    return %c0_i32, %c0_i32_0 : i32, i32
  }
  func.func @transform_7(%arg0: i32) -> (i32, i32) {
    %c0_i32 = arith.constant 0 : i32
    %c0_i32_0 = arith.constant 0 : i32
    %c0_i32_1 = arith.constant 0 : i32
    return %c0_i32, %c0_i32_0 : i32, i32
  }
  func.func @transform_8(%arg0: i32) -> (i32, i32) {
    %c0_i32 = arith.constant 0 : i32
    %c0_i32_0 = arith.constant 0 : i32
    %c0_i32_1 = arith.constant 0 : i32
    return %c0_i32, %c0_i32_0 : i32, i32
  }
  func.func @transform_9(%arg0: i32) -> (i32, i32) {
    %c0_i32 = arith.constant 0 : i32
    %c0_i32_0 = arith.constant 0 : i32
    %c0_i32_1 = arith.constant 0 : i32
    return %c0_i32, %c0_i32_0 : i32, i32
  }
  func.func @transform_10(%arg0: i32) -> (i32, i32) {
    %c0_i32 = arith.constant 0 : i32
    %c0_i32_0 = arith.constant 0 : i32
    %c0_i32_1 = arith.constant 0 : i32
    return %c0_i32, %c0_i32_0 : i32, i32
  }
  func.func @transform_11(%arg0: i32) -> (i32, i32) {
    %c0_i32 = arith.constant 0 : i32
    %c0_i32_0 = arith.constant 0 : i32
    %c0_i32_1 = arith.constant 0 : i32
    return %c0_i32, %c0_i32_0 : i32, i32
  }
  func.func @transform_12(%arg0: i32) -> (i32, i32) {
    %c0_i32 = arith.constant 0 : i32
    %c0_i32_0 = arith.constant 0 : i32
    %c0_i32_1 = arith.constant 0 : i32
    return %c0_i32, %c0_i32_0 : i32, i32
  }
  func.func @transform_13(%arg0: i32) -> (i32, i32, i32) {
    %c0_i32 = arith.constant 0 : i32
    %c0_i32_0 = arith.constant 0 : i32
    %c0_i32_1 = arith.constant 0 : i32
    return %arg0, %c0_i32, %c0_i32_0 : i32, i32, i32
  }
}

</mosaic_0001>

<llo_original>
// kernel: tpu_custom_call.1
$region0: #{tpu_custom_call.1}
  #allocation0 [shape = 'u32[]', space=smem, size = 0x4, offset = 0x4, fixed_abs, tag = 'smem constant byte address 0x4 - core index']
  #allocation1 [shape = 'u32[144,128]{1,0:T(1,128)}', space=vmem, size = 0x12000, scoped, tag = 'internal scratch']
  #allocation2 [shape = 'f32[1,1]{1,0:T(1,128)S(1)}', space=vmem, size = 0x200, scoped, tag = 'scoped memory for tpu_custom_call.1']
  %s0 = inlined_call_operand.vmem [shape: f32[2,2,128], index: 0, kind: input, shape index: {}]
  %s1 = inlined_call_operand.vmem [shape: f32[32,4], index: 1, kind: input, shape index: {}]
  %s2 = inlined_call_operand.vmem [shape: f32[32,1], index: 2, kind: input, shape index: {}]
  %s3 = inlined_call_operand.vmem [shape: f32[32,64], index: 3, kind: input, shape index: {}]
  %s4 = inlined_call_operand.vmem [shape: f32[32,1], index: 4, kind: input, shape index: {}]
  %s5 = inlined_call_operand.vmem [shape: f32[32,2], index: 5, kind: input, shape index: {}]
  %s6 = inlined_call_operand.vmem [shape: f32[32,1], index: 6, kind: input, shape index: {}]
  %s7 = inlined_call_operand.vmem [shape: f32[32,64], index: 7, kind: input, shape index: {}]
  %s8 = inlined_call_operand.vmem [shape: f32[32,1], index: 8, kind: input, shape index: {}]
  %s9 = inlined_call_operand.vmem [shape: f32[32,64], index: 9, kind: input, shape index: {}]
  %s10 = inlined_call_operand.vmem [shape: f32[32,1], index: 10, kind: input, shape index: {}]
  %s11 = inlined_call_operand.vmem [shape: f32[32,1], index: 11, kind: input, shape index: {}]
  %s12 = inlined_call_operand.<no memory space> [shape: f32[1,1], index: 12, kind: input, shape index: {}]
  %s13 = inlined_call_operand.hbm [shape: f32[2,1,128], index: 13, kind: output, shape index: {}]
  %s14 = sld [smem:[#allocation0]]
  $region85: #{tpu_custom_call.1} parent=0
    _
  %s16 = ssub.s32 1, %s14
  %s17 = scalar_select 0, %s16, %s14
  %v18 = vstv %s12
  %19 = vst [vmem:[#allocation2] sm:$0x1] %v18
  $region1: #{tpu_custom_call.1} parent=0
    #allocation3 [shape = 'u8[1024]{0}', space=vmem, size = 0x400, scoped, tag = 'output window, operand 0']
    #allocation4 [shape = 's32[2]{0}', space=sflag, size = 0x8, scoped, tag = 'scoped memory for tpu_custom_call.1']
    %20 = vsyncpa [#allocation4], 0
    %s21 = scalar_lea.sflag [#allocation4], 1
    %22 = vsyncpa %s21, 0
    loop: start=0, step=1, limit=4
    $region2: #{tpu_custom_call.1} parent=1 // loop_pre_header
      _
    $region3: #{tpu_custom_call.1} parent=1 // loop_header
      %s24 = sphi 0, %s28
      %p25 = scmp.ge.s32.totalorder %s24, 4
      %s34 = sphi 0, %s36
      %s37 = sphi 0, %s34
      %s38 = sphi 0, %s37
      %s54 = sphi 0, %s38
      %s58 = sphi 0, %s58
      %s60 = sphi 0, %s58
      %s61 = sphi 0, %s60
      %s75 = sphi 0, %s61
      %s79 = sphi 0, %s79
      %s81 = sphi 0, %s79
      %s82 = sphi 0, %s81
      %s96 = sphi 0, %s82
      %s100 = sphi 0, %s100
      %s102 = sphi 0, %s100
      %s103 = sphi 0, %s102
      %s117 = sphi 0, %s103
      %s121 = sphi 0, %s121
      %s123 = sphi 0, %s121
      %s124 = sphi 0, %s123
      %s138 = sphi 0, %s124
      %s142 = sphi 0, %s142
      %s144 = sphi 0, %s142
      %s145 = sphi 0, %s144
      %s159 = sphi 0, %s145
      %s163 = sphi 0, %s163
      %s165 = sphi 0, %s163
      %s166 = sphi 0, %s165
      %s180 = sphi 0, %s166
      %s184 = sphi 0, %s184
      %s186 = sphi 0, %s184
      %s187 = sphi 0, %s186
      %s201 = sphi 0, %s187
      %s205 = sphi 0, %s205
      %s207 = sphi 0, %s205
      %s208 = sphi 0, %s207
      %s222 = sphi 0, %s208
      %s226 = sphi 0, %s226
      %s228 = sphi 0, %s226
      %s229 = sphi 0, %s228
      %s243 = sphi 0, %s229
      %s247 = sphi 0, %s247
      %s249 = sphi 0, %s247
      %s250 = sphi 0, %s249
      %s264 = sphi 0, %s250
      %s268 = sphi 0, %s268
      %s270 = sphi 0, %s268
      %s271 = sphi 0, %s270
      %s285 = sphi 0, %s271
      %s289 = sphi 0, %s289
      %s291 = sphi 0, %s289
      %s292 = sphi 0, %s291
      %s306 = sphi 0, %s292
      %s312 = sphi 0, %s314
      %s315 = sphi 0, %s312
      %s316 = sphi 0, %s315
      %s332 = sphi 0, %s316
    $region4: #{tpu_custom_call.1} parent=1 // loop_header_branch
      %27 = sbr.rel (%p25) target = $region8
    $region5: #{tpu_custom_call.1} parent=1 // loop_body
      %s29 = ssub.s32 %s24, 1
      %s30 = ssub.s32 %s24, 2
      %s31 = sadd.s32 %s24, 1
      %s32 = ssub.s32 %s24, %s31
      %p33 = scmp.eq.s32.totalorder %s32, 0
      %s35 = sadd.s32 %s34, 1
      %s36 = scalar_select %p33, %s34, %s35
      %p39 = pneg %p33
      %p40 = scmp.eq.s32.totalorder %s24, 1
      %p41 = por %p39, %p40
      %p42 = scmp.ne.s32.totalorder %s34, %s37
      %p43 = scmp.eq.s32.totalorder %s24, 0
      %p44 = por %p42, %p43
      %p45 = scmp.ne.s32.totalorder %s34, %s37
      %p46 = scmp.eq.s32.totalorder %s29, 1
      %p47 = por %p45, %p46
      %p48 = scmp.ne.s32.totalorder %s37, %s38
      %p49 = scmp.eq.s32.totalorder %s29, 0
      %p50 = por %p48, %p49
      %p51 = scmp.ne.s32.totalorder %s37, %s38
      %p52 = scmp.eq.s32.totalorder %s30, 1
      %p53 = por %p51, %p52
      %p55 = scmp.ne.s32.totalorder %s38, %s54
      %p56 = scmp.eq.s32.totalorder %s30, 0
      %p57 = por %p55, %p56
      %s59 = sadd.s32 %s58, 1
      %p62 = scmp.eq.s32.totalorder %s24, 1
      %p63 = scmp.ne.s32.totalorder %s58, %s60
      %p64 = scmp.eq.s32.totalorder %s24, 0
      %p65 = por %p63, %p64
      %p66 = scmp.ne.s32.totalorder %s58, %s60
      %p67 = scmp.eq.s32.totalorder %s29, 1
      %p68 = por %p66, %p67
      %p69 = scmp.ne.s32.totalorder %s60, %s61
      %p70 = scmp.eq.s32.totalorder %s29, 0
      %p71 = por %p69, %p70
      %p72 = scmp.ne.s32.totalorder %s60, %s61
      %p73 = scmp.eq.s32.totalorder %s30, 1
      %p74 = por %p72, %p73
      %p76 = scmp.ne.s32.totalorder %s61, %s75
      %p77 = scmp.eq.s32.totalorder %s30, 0
      %p78 = por %p76, %p77
      %s80 = sadd.s32 %s79, 1
      %p83 = scmp.eq.s32.totalorder %s24, 1
      %p84 = scmp.ne.s32.totalorder %s79, %s81
      %p85 = scmp.eq.s32.totalorder %s24, 0
      %p86 = por %p84, %p85
      %p87 = scmp.ne.s32.totalorder %s79, %s81
      %p88 = scmp.eq.s32.totalorder %s29, 1
      %p89 = por %p87, %p88
      %p90 = scmp.ne.s32.totalorder %s81, %s82
      %p91 = scmp.eq.s32.totalorder %s29, 0
      %p92 = por %p90, %p91
      %p93 = scmp.ne.s32.totalorder %s81, %s82
      %p94 = scmp.eq.s32.totalorder %s30, 1
      %p95 = por %p93, %p94
      %p97 = scmp.ne.s32.totalorder %s82, %s96
      %p98 = scmp.eq.s32.totalorder %s30, 0
      %p99 = por %p97, %p98
      %s101 = sadd.s32 %s100, 1
      %p104 = scmp.eq.s32.totalorder %s24, 1
      %p105 = scmp.ne.s32.totalorder %s100, %s102
      %p106 = scmp.eq.s32.totalorder %s24, 0
      %p107 = por %p105, %p106
      %p108 = scmp.ne.s32.totalorder %s100, %s102
      %p109 = scmp.eq.s32.totalorder %s29, 1
      %p110 = por %p108, %p109
      %p111 = scmp.ne.s32.totalorder %s102, %s103
      %p112 = scmp.eq.s32.totalorder %s29, 0
      %p113 = por %p111, %p112
      %p114 = scmp.ne.s32.totalorder %s102, %s103
      %p115 = scmp.eq.s32.totalorder %s30, 1
      %p116 = por %p114, %p115
      %p118 = scmp.ne.s32.totalorder %s103, %s117
      %p119 = scmp.eq.s32.totalorder %s30, 0
      %p120 = por %p118, %p119
      %s122 = sadd.s32 %s121, 1
      %p125 = scmp.eq.s32.totalorder %s24, 1
      %p126 = scmp.ne.s32.totalorder %s121, %s123
      %p127 = scmp.eq.s32.totalorder %s24, 0
      %p128 = por %p126, %p127
      %p129 = scmp.ne.s32.totalorder %s121, %s123
      %p130 = scmp.eq.s32.totalorder %s29, 1
      %p131 = por %p129, %p130
      %p132 = scmp.ne.s32.totalorder %s123, %s124
      %p133 = scmp.eq.s32.totalorder %s29, 0
      %p134 = por %p132, %p133
      %p135 = scmp.ne.s32.totalorder %s123, %s124
      %p136 = scmp.eq.s32.totalorder %s30, 1
      %p137 = por %p135, %p136
      %p139 = scmp.ne.s32.totalorder %s124, %s138
      %p140 = scmp.eq.s32.totalorder %s30, 0
      %p141 = por %p139, %p140
      %s143 = sadd.s32 %s142, 1
      %p146 = scmp.eq.s32.totalorder %s24, 1
      %p147 = scmp.ne.s32.totalorder %s142, %s144
      %p148 = scmp.eq.s32.totalorder %s24, 0
      %p149 = por %p147, %p148
      %p150 = scmp.ne.s32.totalorder %s142, %s144
      %p151 = scmp.eq.s32.totalorder %s29, 1
      %p152 = por %p150, %p151
      %p153 = scmp.ne.s32.totalorder %s144, %s145
      %p154 = scmp.eq.s32.totalorder %s29, 0
      %p155 = por %p153, %p154
      %p156 = scmp.ne.s32.totalorder %s144, %s145
      %p157 = scmp.eq.s32.totalorder %s30, 1
      %p158 = por %p156, %p157
      %p160 = scmp.ne.s32.totalorder %s145, %s159
      %p161 = scmp.eq.s32.totalorder %s30, 0
      %p162 = por %p160, %p161
      %s164 = sadd.s32 %s163, 1
      %p167 = scmp.eq.s32.totalorder %s24, 1
      %p168 = scmp.ne.s32.totalorder %s163, %s165
      %p169 = scmp.eq.s32.totalorder %s24, 0
      %p170 = por %p168, %p169
      %p171 = scmp.ne.s32.totalorder %s163, %s165
      %p172 = scmp.eq.s32.totalorder %s29, 1
      %p173 = por %p171, %p172
      %p174 = scmp.ne.s32.totalorder %s165, %s166
      %p175 = scmp.eq.s32.totalorder %s29, 0
      %p176 = por %p174, %p175
      %p177 = scmp.ne.s32.totalorder %s165, %s166
      %p178 = scmp.eq.s32.totalorder %s30, 1
      %p179 = por %p177, %p178
      %p181 = scmp.ne.s32.totalorder %s166, %s180
      %p182 = scmp.eq.s32.totalorder %s30, 0
      %p183 = por %p181, %p182
      %s185 = sadd.s32 %s184, 1
      %p188 = scmp.eq.s32.totalorder %s24, 1
      %p189 = scmp.ne.s32.totalorder %s184, %s186
      %p190 = scmp.eq.s32.totalorder %s24, 0
      %p191 = por %p189, %p190
      %p192 = scmp.ne.s32.totalorder %s184, %s186
      %p193 = scmp.eq.s32.totalorder %s29, 1
      %p194 = por %p192, %p193
      %p195 = scmp.ne.s32.totalorder %s186, %s187
      %p196 = scmp.eq.s32.totalorder %s29, 0
      %p197 = por %p195, %p196
      %p198 = scmp.ne.s32.totalorder %s186, %s187
      %p199 = scmp.eq.s32.totalorder %s30, 1
      %p200 = por %p198, %p199
      %p202 = scmp.ne.s32.totalorder %s187, %s201
      %p203 = scmp.eq.s32.totalorder %s30, 0
      %p204 = por %p202, %p203
      %s206 = sadd.s32 %s205, 1
      %p209 = scmp.eq.s32.totalorder %s24, 1
      %p210 = scmp.ne.s32.totalorder %s205, %s207
      %p211 = scmp.eq.s32.totalorder %s24, 0
      %p212 = por %p210, %p211
      %p213 = scmp.ne.s32.totalorder %s205, %s207
      %p214 = scmp.eq.s32.totalorder %s29, 1
      %p215 = por %p213, %p214
      %p216 = scmp.ne.s32.totalorder %s207, %s208
      %p217 = scmp.eq.s32.totalorder %s29, 0
      %p218 = por %p216, %p217
      %p219 = scmp.ne.s32.totalorder %s207, %s208
      %p220 = scmp.eq.s32.totalorder %s30, 1
      %p221 = por %p219, %p220
      %p223 = scmp.ne.s32.totalorder %s208, %s222
      %p224 = scmp.eq.s32.totalorder %s30, 0
      %p225 = por %p223, %p224
      %s227 = sadd.s32 %s226, 1
      %p230 = scmp.eq.s32.totalorder %s24, 1
      %p231 = scmp.ne.s32.totalorder %s226, %s228
      %p232 = scmp.eq.s32.totalorder %s24, 0
      %p233 = por %p231, %p232
      %p234 = scmp.ne.s32.totalorder %s226, %s228
      %p235 = scmp.eq.s32.totalorder %s29, 1
      %p236 = por %p234, %p235
      %p237 = scmp.ne.s32.totalorder %s228, %s229
      %p238 = scmp.eq.s32.totalorder %s29, 0
      %p239 = por %p237, %p238
      %p240 = scmp.ne.s32.totalorder %s228, %s229
      %p241 = scmp.eq.s32.totalorder %s30, 1
      %p242 = por %p240, %p241
      %p244 = scmp.ne.s32.totalorder %s229, %s243
      %p245 = scmp.eq.s32.totalorder %s30, 0
      %p246 = por %p244, %p245
      %s248 = sadd.s32 %s247, 1
      %p251 = scmp.eq.s32.totalorder %s24, 1
      %p252 = scmp.ne.s32.totalorder %s247, %s249
      %p253 = scmp.eq.s32.totalorder %s24, 0
      %p254 = por %p252, %p253
      %p255 = scmp.ne.s32.totalorder %s247, %s249
      %p256 = scmp.eq.s32.totalorder %s29, 1
      %p257 = por %p255, %p256
      %p258 = scmp.ne.s32.totalorder %s249, %s250
      %p259 = scmp.eq.s32.totalorder %s29, 0
      %p260 = por %p258, %p259
      %p261 = scmp.ne.s32.totalorder %s249, %s250
      %p262 = scmp.eq.s32.totalorder %s30, 1
      %p263 = por %p261, %p262
      %p265 = scmp.ne.s32.totalorder %s250, %s264
      %p266 = scmp.eq.s32.totalorder %s30, 0
      %p267 = por %p265, %p266
      %s269 = sadd.s32 %s268, 1
      %p272 = scmp.eq.s32.totalorder %s24, 1
      %p273 = scmp.ne.s32.totalorder %s268, %s270
      %p274 = scmp.eq.s32.totalorder %s24, 0
      %p275 = por %p273, %p274
      %p276 = scmp.ne.s32.totalorder %s268, %s270
      %p277 = scmp.eq.s32.totalorder %s29, 1
      %p278 = por %p276, %p277
      %p279 = scmp.ne.s32.totalorder %s270, %s271
      %p280 = scmp.eq.s32.totalorder %s29, 0
      %p281 = por %p279, %p280
      %p282 = scmp.ne.s32.totalorder %s270, %s271
      %p283 = scmp.eq.s32.totalorder %s30, 1
      %p284 = por %p282, %p283
      %p286 = scmp.ne.s32.totalorder %s271, %s285
      %p287 = scmp.eq.s32.totalorder %s30, 0
      %p288 = por %p286, %p287
      %s290 = sadd.s32 %s289, 1
      %p293 = scmp.eq.s32.totalorder %s24, 1
      %p294 = scmp.ne.s32.totalorder %s289, %s291
      %p295 = scmp.eq.s32.totalorder %s24, 0
      %p296 = por %p294, %p295
      %p297 = scmp.ne.s32.totalorder %s289, %s291
      %p298 = scmp.eq.s32.totalorder %s29, 1
      %p299 = por %p297, %p298
      %p300 = scmp.ne.s32.totalorder %s291, %s292
      %p301 = scmp.eq.s32.totalorder %s29, 0
      %p302 = por %p300, %p301
      %p303 = scmp.ne.s32.totalorder %s291, %s292
      %p304 = scmp.eq.s32.totalorder %s30, 1
      %p305 = por %p303, %p304
      %p307 = scmp.ne.s32.totalorder %s292, %s306
      %p308 = scmp.eq.s32.totalorder %s30, 0
      %p309 = por %p307, %p308
      %s310 = ssub.s32 %s24, %s31
      %p311 = scmp.eq.s32.totalorder %s310, 0
      %s313 = sadd.s32 %s312, 1
      %s314 = scalar_select %p311, %s312, %s313
      %p317 = pneg %p311
      %p318 = scmp.eq.s32.totalorder %s24, 1
      %p319 = por %p317, %p318
      %p320 = scmp.ne.s32.totalorder %s312, %s315
      %p321 = scmp.eq.s32.totalorder %s24, 0
      %p322 = por %p320, %p321
      %p323 = scmp.ne.s32.totalorder %s312, %s315
      %p324 = scmp.eq.s32.totalorder %s29, 1
      %p325 = por %p323, %p324
      %p326 = scmp.ne.s32.totalorder %s315, %s316
      %p327 = scmp.eq.s32.totalorder %s29, 0
      %p328 = por %p326, %p327
      %p329 = scmp.ne.s32.totalorder %s315, %s316
      %p330 = scmp.eq.s32.totalorder %s30, 1
      %p331 = por %p329, %p330
      %p333 = scmp.ne.s32.totalorder %s316, %s332
      %p334 = scmp.eq.s32.totalorder %s30, 0
      %p335 = por %p333, %p334
      %p336 = scmp.le.s32.totalorder 1, %s24
      %p337 = scmp.lt.s32.totalorder %s24, 3
      %p338 = pnand %p336, %p337
      %p339 = pneg %p338
      // Predicated region
      $region9: #{tpu_custom_call.1} parent=5 // pred_check
        _
      $region10: #{tpu_custom_call.1} parent=5 // pred_check_branch
        %341 = sbr.rel (%p338) target = $region12
      $region11: #{tpu_custom_call.1} parent=5 // pred_region
        %s342 = ssub.s32 %s24, 1
        // Predicated region
        $region13: #{tpu_custom_call.1} parent=11 // pred_check
          %p343 = pneg %p71
        $region14: #{tpu_custom_call.1} parent=11 // pred_check_branch
          %345 = sbr.rel (%p343) target = $region16
        $region15: #{tpu_custom_call.1} parent=11 // pred_region
          _
        $region16: #{tpu_custom_call.1} parent=11 // pred_fallthru
          _
        // Predicated region
        $region17: #{tpu_custom_call.1} parent=11 // pred_check
          %p346 = pneg %p92
        $region18: #{tpu_custom_call.1} parent=11 // pred_check_branch
          %348 = sbr.rel (%p346) target = $region20
        $region19: #{tpu_custom_call.1} parent=11 // pred_region
          _
        $region20: #{tpu_custom_call.1} parent=11 // pred_fallthru
          _
        // Predicated region
        $region21: #{tpu_custom_call.1} parent=11 // pred_check
          %p349 = pneg %p113
        $region22: #{tpu_custom_call.1} parent=11 // pred_check_branch
          %351 = sbr.rel (%p349) target = $region24
        $region23: #{tpu_custom_call.1} parent=11 // pred_region
          _
        $region24: #{tpu_custom_call.1} parent=11 // pred_fallthru
          _
        // Predicated region
        $region25: #{tpu_custom_call.1} parent=11 // pred_check
          %p352 = pneg %p134
        $region26: #{tpu_custom_call.1} parent=11 // pred_check_branch
          %354 = sbr.rel (%p352) target = $region28
        $region27: #{tpu_custom_call.1} parent=11 // pred_region
          _
        $region28: #{tpu_custom_call.1} parent=11 // pred_fallthru
          _
        // Predicated region
        $region29: #{tpu_custom_call.1} parent=11 // pred_check
          %p355 = pneg %p155
        $region30: #{tpu_custom_call.1} parent=11 // pred_check_branch
          %357 = sbr.rel (%p355) target = $region32
        $region31: #{tpu_custom_call.1} parent=11 // pred_region
          _
        $region32: #{tpu_custom_call.1} parent=11 // pred_fallthru
          _
        // Predicated region
        $region33: #{tpu_custom_call.1} parent=11 // pred_check
          %p358 = pneg %p176
        $region34: #{tpu_custom_call.1} parent=11 // pred_check_branch
          %360 = sbr.rel (%p358) target = $region36
        $region35: #{tpu_custom_call.1} parent=11 // pred_region
          _
        $region36: #{tpu_custom_call.1} parent=11 // pred_fallthru
          _
        // Predicated region
        $region37: #{tpu_custom_call.1} parent=11 // pred_check
          %p361 = pneg %p197
        $region38: #{tpu_custom_call.1} parent=11 // pred_check_branch
          %363 = sbr.rel (%p361) target = $region40
        $region39: #{tpu_custom_call.1} parent=11 // pred_region
          _
        $region40: #{tpu_custom_call.1} parent=11 // pred_fallthru
          _
        // Predicated region
        $region41: #{tpu_custom_call.1} parent=11 // pred_check
          %p364 = pneg %p218
        $region42: #{tpu_custom_call.1} parent=11 // pred_check_branch
          %366 = sbr.rel (%p364) target = $region44
        $region43: #{tpu_custom_call.1} parent=11 // pred_region
          _
        $region44: #{tpu_custom_call.1} parent=11 // pred_fallthru
          _
        // Predicated region
        $region45: #{tpu_custom_call.1} parent=11 // pred_check
          %p367 = pneg %p239
        $region46: #{tpu_custom_call.1} parent=11 // pred_check_branch
          %369 = sbr.rel (%p367) target = $region48
        $region47: #{tpu_custom_call.1} parent=11 // pred_region
          _
        $region48: #{tpu_custom_call.1} parent=11 // pred_fallthru
          _
        // Predicated region
        $region49: #{tpu_custom_call.1} parent=11 // pred_check
          %p370 = pneg %p260
        $region50: #{tpu_custom_call.1} parent=11 // pred_check_branch
          %372 = sbr.rel (%p370) target = $region52
        $region51: #{tpu_custom_call.1} parent=11 // pred_region
          _
        $region52: #{tpu_custom_call.1} parent=11 // pred_fallthru
          _
        // Predicated region
        $region53: #{tpu_custom_call.1} parent=11 // pred_check
          %p373 = pneg %p281
        $region54: #{tpu_custom_call.1} parent=11 // pred_check_branch
          %375 = sbr.rel (%p373) target = $region56
        $region55: #{tpu_custom_call.1} parent=11 // pred_region
          _
        $region56: #{tpu_custom_call.1} parent=11 // pred_fallthru
          _
        // Predicated region
        $region57: #{tpu_custom_call.1} parent=11 // pred_check
          %p376 = pneg %p302
        $region58: #{tpu_custom_call.1} parent=11 // pred_check_branch
          %378 = sbr.rel (%p376) target = $region60
        $region59: #{tpu_custom_call.1} parent=11 // pred_region
          _
        $region60: #{tpu_custom_call.1} parent=11 // pred_fallthru
          _
      $region12: #{tpu_custom_call.1} parent=5 // pred_fallthru
        _
      %p379 = scmp.lt.s32.totalorder %s24, 2
      // Predicated region
      $region61: #{tpu_custom_call.1} parent=5 // pred_check
        %p380 = pneg %p379
      $region62: #{tpu_custom_call.1} parent=5 // pred_check_branch
        %382 = sbr.rel (%p380) target = $region64
      $region63: #{tpu_custom_call.1} parent=5 // pred_region
        // Predicated region
        $region65: #{tpu_custom_call.1} parent=63 // pred_check
          %p383 = pneg %p44
        $region66: #{tpu_custom_call.1} parent=63 // pred_check_branch
          %385 = sbr.rel (%p383) target = $region68
        $region67: #{tpu_custom_call.1} parent=63 // pred_region
          %p386 = scmp.lt.s32.totalorder %s24, 1
          %s387 = scalar_select %p386, %s24, 1
          %s388 = smul.addr %s387, 2
          %s389 = scalar_lea.vmem %s0, %s388
        $region68: #{tpu_custom_call.1} parent=63 // pred_fallthru
          _
      $region64: #{tpu_custom_call.1} parent=5 // pred_fallthru
        _
      %p390 = scmp.le.s32.totalorder 1, %s24
      %p391 = scmp.lt.s32.totalorder %s24, 3
      %p392 = pnand %p390, %p391
      %p393 = pneg %p392
      // Predicated region
      $region69: #{tpu_custom_call.1} parent=5 // pred_check
        _
      $region70: #{tpu_custom_call.1} parent=5 // pred_check_branch
        %395 = sbr.rel (%p392) target = $region72
      $region71: #{tpu_custom_call.1} parent=5 // pred_region
        %s396 = ssub.s32 %s24, 1
        %p397 = scmp.lt.s32.totalorder %s29, 1
        %s398 = scalar_select %p397, %s29, 1
        %s399 = smul.addr %s398, 2
        %s400 = scalar_lea.vmem %s0, %s399
        %p401 = pneg %p50
        %p402 = pneg %p47
        %p403 = pneg %p71
        %p404 = pneg %p68
        %p405 = pneg %p92
        %p406 = pneg %p89
        %p407 = pneg %p113
        %p408 = pneg %p110
        %p409 = pneg %p134
        %p410 = pneg %p131
        %p411 = pneg %p155
        %p412 = pneg %p152
        %p413 = pneg %p176
        %p414 = pneg %p173
        %p415 = pneg %p197
        %p416 = pneg %p194
        %p417 = pneg %p218
        %p418 = pneg %p215
        %p419 = pneg %p239
        %p420 = pneg %p236
        %p421 = pneg %p260
        %p422 = pneg %p257
        %p423 = pneg %p281
        %p424 = pneg %p278
        %p425 = pneg %p302
        %p426 = pneg %p299
        %p427 = pneg %p328
        %p428 = pneg %p325
        %s429 = sand.u32 %s315, 1
        %s430 = scalar_lea.sflag [#allocation4], %s429
        %s431 = sand.u32 %s315, 1
        %s432 = scalar_lea.vmem [#allocation3], %s431
        %p433 = scmp.lt.s32.totalorder %s29, 1
        %s434 = scalar_select %p433, %s29, 1
        %s435 = smul.addr %s434, 2
        %s436 = scalar_lea.vmem %s0, %s435
        %v437 = vld [vmem:[%s436] sm:$0x3]
        %v438 = vld [vmem:[%s1] sm:$0xff]
        %v439 = vld [vmem:[%s1 + $0x8] sm:$0xff]
        %v440 = vld [vmem:[%s1 + $0x10] sm:$0xff]
        %v441 = vld [vmem:[%s1 + $0x18] sm:$0xff]
        %v442 = vld [vmem:[%s2] sm:$0xff]
        %v443 = vld [vmem:[%s2 + $0x8] sm:$0xff]
        %v444 = vld [vmem:[%s2 + $0x10] sm:$0xff]
        %v445 = vld [vmem:[%s2 + $0x18] sm:$0xff]
        %v446 = vld [vmem:[%s3] sm:$0xff]
        %v447 = vld [vmem:[%s3 + $0x8] sm:$0xff]
        %v448 = vld [vmem:[%s3 + $0x10] sm:$0xff]
        %v449 = vld [vmem:[%s3 + $0x18] sm:$0xff]
        %v450 = vld [vmem:[%s4] sm:$0xff]
        %v451 = vld [vmem:[%s4 + $0x8] sm:$0xff]
        %v452 = vld [vmem:[%s4 + $0x10] sm:$0xff]
        %v453 = vld [vmem:[%s4 + $0x18] sm:$0xff]
        %454 = vrot.lane.b32.xlu0 %v437, 1
        %v455 = vpop.permute.xlu0 %454
        %v456 = vlaneseq
        %v457 = vand.u32 %v456, 127
        %vm458 = vcmp.ge.s32.totalorder %v457, 1
        %v459 = vsel %vm458, %v455, 0.0
        %v461 = vrot.slane %v437, 6
        %vm463 = vcmask 1041408
        %v464 = vsel %vm463, %v459, %v461
        %466 = vset.pattern.permute.xlu0 0
        %467 = vperm.xlu0 %466, %v442
        %v468 = vpop.permute.xlu0 %467
        %471 = vset.pattern.permute.xlu0 0
        %472 = vperm.xlu0 %471, %v443
        %v473 = vpop.permute.xlu0 %472
        %476 = vset.pattern.permute.xlu0 0
        %477 = vperm.xlu0 %476, %v444
        %v478 = vpop.permute.xlu0 %477
        %481 = vset.pattern.permute.xlu0 0
        %482 = vperm.xlu0 %481, %v445
        %v483 = vpop.permute.xlu0 %482
        %vm485 = vcmask 31744
        %v487 = vsel %vm485, %v438, 0
        %v490 = vsel %vm485, %v439, 0
        %v493 = vsel %vm485, %v440, 0
        %v496 = vsel %vm485, %v441, 0
        %vm498 = vcmask 1043456
        %v500 = vsel %vm498, %v464, 0
        %502 = vmatprep.subr.mxu0 0.0
        %503 = vmatpush1.msra.mxu0 %v500
        %504 = vmatprep.subr.mxu0 0.0
        %505 = vmatpush1.msra.mxu0 0.0
        %506 = vmatprep.subr.mxu0 0.0
        %507 = vmatpush1.msra.mxu0 0.0
        %508 = vmatprep.subr.mxu0 0.0
        %509 = vmatpush1.msra.mxu0 0.0
        %510 = vmatprep.subr.mxu0 0.0
        %511 = vmatpush1.msra.mxu0 0.0
        %512 = vmatprep.subr.mxu0 0.0
        %513 = vmatpush1.msra.mxu0 0.0
        %514 = vmatprep.subr.mxu0 0.0
        %515 = vmatpush1.msra.mxu0 0.0
        %516 = vmatprep.subr.mxu0 0.0
        %517 = vmatpush1.msra.mxu0 0.0
        %518 = vmatprep.subr.mxu0 0.0
        %519 = vmatpush1.msra.mxu0 0.0
        %520 = vmatprep.subr.mxu0 0.0
        %521 = vmatpush1.msra.mxu0 0.0
        %522 = vmatprep.subr.mxu0 0.0
        %523 = vmatpush1.msra.mxu0 0.0
        %524 = vmatprep.subr.mxu0 0.0
        %525 = vmatpush1.msra.mxu0 0.0
        %526 = vmatprep.subr.mxu0 0.0
        %527 = vmatpush1.msra.mxu0 0.0
        %528 = vmatprep.subr.mxu0 0.0
        %529 = vmatpush1.msra.mxu0 0.0
        %530 = vmatprep.subr.mxu0 0.0
        %531 = vmatpush1.msra.mxu0 0.0
        %532 = vmatprep.subr.mxu0 0.0
        %533 = vmatpush1.msra.mxu0 0.0
        %534 = vmatprep.subr.mxu0 0.0
        %535 = vmatpush1.msra.mxu0 0.0
        %536 = vmatprep.subr.mxu0 0.0
        %537 = vmatpush1.msra.mxu0 0.0
        %538 = vmatprep.subr.mxu0 0.0
        %539 = vmatpush1.msra.mxu0 0.0
        %540 = vmatprep.subr.mxu0 0.0
        %541 = vmatpush1.msra.mxu0 0.0
        %542 = vmatprep.subr.mxu0 0.0
        %543 = vmatpush1.msra.mxu0 0.0
        %544 = vmatprep.subr.mxu0 0.0
        %545 = vmatpush1.msra.mxu0 0.0
        %546 = vmatprep.subr.mxu0 0.0
        %547 = vmatpush1.msra.mxu0 0.0
        %548 = vmatprep.subr.mxu0 0.0
        %549 = vmatpush1.msra.mxu0 0.0
        %550 = vmatprep.subr.mxu0 0.0
        %551 = vmatpush1.msra.mxu0 0.0
        %552 = vmatprep.subr.mxu0 0.0
        %553 = vmatpush1.msra.mxu0 0.0
        %554 = vmatprep.subr.mxu0 0.0
        %555 = vmatpush1.msra.mxu0 0.0
        %556 = vmatprep.subr.mxu0 0.0
        %557 = vmatpush1.msra.mxu0 0.0
        %558 = vmatprep.subr.mxu0 0.0
        %559 = vmatpush1.msra.mxu0 0.0
        %560 = vmatprep.subr.mxu0 0.0
        %561 = vmatpush1.msra.mxu0 0.0
        %562 = vmatprep.subr.mxu0 0.0
        %563 = vmatpush1.msra.mxu0 0.0
        %564 = vmatprep.subr.mxu0 0.0
        %565 = vmatpush1.msra.mxu0 0.0
        %566 = vmatprep.mubr.f32.mxu0 0.0
        %567 = vmatmul.mubr.f32.gmra.mrb[0].mxu0 %v487
        %v568 = vpop.f32.mrb[0].mxu0
        %v569 = vadd.f32 %v468, %v568
        %v570 = vpop.f32.mrb[0].mxu0
        %571 = vmatprep.mubr.f32.mxu0 0.0
        %572 = vmatmul.mubr.f32.gmra.mrb[0].mxu0 %v490
        %v573 = vpop.f32.mrb[0].mxu0
        %v574 = vadd.f32 %v473, %v573
        %v575 = vpop.f32.mrb[0].mxu0
        %576 = vmatprep.mubr.f32.mxu0 0.0
        %577 = vmatmul.mubr.f32.gmra.mrb[0].mxu0 %v493
        %v578 = vpop.f32.mrb[0].mxu0
        %v579 = vadd.f32 %v478, %v578
        %v580 = vpop.f32.mrb[0].mxu0
        %581 = vmatprep.mubr.f32.mxu0 0.0
        %582 = vmatmul.mubr.f32.gmra.mrb[0].mxu0 %v496
        %v583 = vpop.f32.mrb[0].mxu0
        %v584 = vadd.f32 %v483, %v583
        %v585 = vpop.f32.mrb[0].mxu0
        %586 = vdwg.mxu0
        %v587 = vmax.f32 %v569, 0.0
        %v588 = vmax.f32 %v574, 0.0
        %v589 = vmax.f32 %v579, 0.0
        %v590 = vmax.f32 %v584, 0.0
        %591 = vrot.lane.b32.xlu0 %v587, 1
        %v592 = vpop.permute.xlu0 %591
        %593 = vrot.lane.b32.xlu0 %v588, 1
        %v594 = vpop.permute.xlu0 %593
        %595 = vrot.lane.b32.xlu0 %v589, 1
        %v596 = vpop.permute.xlu0 %595
        %597 = vrot.lane.b32.xlu0 %v590, 1
        %v598 = vpop.permute.xlu0 %597
        %v599 = vsel %vm458, %v592, 0.0
        %v600 = vsel %vm458, %v594, 0.0
        %v601 = vsel %vm458, %v596, 0.0
        %v602 = vsel %vm458, %v598, 0.0
        %604 = vset.pattern.permute.xlu0 0
        %605 = vperm.xlu0 %604, %v450
        %v606 = vpop.permute.xlu0 %605
        %609 = vset.pattern.permute.xlu0 0
        %610 = vperm.xlu0 %609, %v451
        %v611 = vpop.permute.xlu0 %610
        %614 = vset.pattern.permute.xlu0 0
        %615 = vperm.xlu0 %614, %v452
        %v616 = vpop.permute.xlu0 %615
        %619 = vset.pattern.permute.xlu0 0
        %620 = vperm.xlu0 %619, %v453
        %v621 = vpop.permute.xlu0 %620
        %vm623 = vcmask 523264
        %v625 = vsel %vm623, %v446, 0
        %v628 = vsel %vm623, %v447, 0
        %v631 = vsel %vm623, %v448, 0
        %v634 = vsel %vm623, %v449, 0
        %636 = vmatprep.subr.mxu0 0.0
        %637 = vmatpush1.msra.mxu0 %v599
        %638 = vmatprep.subr.mxu0 0.0
        %639 = vmatpush1.msra.mxu0 %v600
        %640 = vmatprep.subr.mxu0 0.0
        %641 = vmatpush1.msra.mxu0 %v601
        %642 = vmatprep.subr.mxu0 0.0
        %643 = vmatpush1.msra.mxu0 %v602
        %644 = vmatprep.subr.mxu0 0.0
        %645 = vmatpush1.msra.mxu0 %v587
        %646 = vmatprep.subr.mxu0 0.0
        %647 = vmatpush1.msra.mxu0 %v588
        %648 = vmatprep.subr.mxu0 0.0
        %649 = vmatpush1.msra.mxu0 %v589
        %650 = vmatprep.subr.mxu0 0.0
        %651 = vmatpush1.msra.mxu0 %v590
        %652 = vmatprep.subr.mxu0 0.0
        %653 = vmatpush1.msra.mxu0 0.0
        %654 = vmatprep.subr.mxu0 0.0
        %655 = vmatpush1.msra.mxu0 0.0
        %656 = vmatprep.subr.mxu0 0.0
        %657 = vmatpush1.msra.mxu0 0.0
        %658 = vmatprep.subr.mxu0 0.0
        %659 = vmatpush1.msra.mxu0 0.0
        %660 = vmatprep.subr.mxu0 0.0
        %661 = vmatpush1.msra.mxu0 0.0
        %662 = vmatprep.subr.mxu0 0.0
        %663 = vmatpush1.msra.mxu0 0.0
        %664 = vmatprep.subr.mxu0 0.0
        %665 = vmatpush1.msra.mxu0 0.0
        %666 = vmatprep.subr.mxu0 0.0
        %667 = vmatpush1.msra.mxu0 0.0
        %668 = vmatprep.subr.mxu0 0.0
        %669 = vmatpush1.msra.mxu0 0.0
        %670 = vmatprep.subr.mxu0 0.0
        %671 = vmatpush1.msra.mxu0 0.0
        %672 = vmatprep.subr.mxu0 0.0
        %673 = vmatpush1.msra.mxu0 0.0
        %674 = vmatprep.subr.mxu0 0.0
        %675 = vmatpush1.msra.mxu0 0.0
        %676 = vmatprep.subr.mxu0 0.0
        %677 = vmatpush1.msra.mxu0 0.0
        %678 = vmatprep.subr.mxu0 0.0
        %679 = vmatpush1.msra.mxu0 0.0
        %680 = vmatprep.subr.mxu0 0.0
        %681 = vmatpush1.msra.mxu0 0.0
        %682 = vmatprep.subr.mxu0 0.0
        %683 = vmatpush1.msra.mxu0 0.0
        %684 = vmatprep.subr.mxu0 0.0
        %685 = vmatpush1.msra.mxu0 0.0
        %686 = vmatprep.subr.mxu0 0.0
        %687 = vmatpush1.msra.mxu0 0.0
        %688 = vmatprep.subr.mxu0 0.0
        %689 = vmatpush1.msra.mxu0 0.0
        %690 = vmatprep.subr.mxu0 0.0
        %691 = vmatpush1.msra.mxu0 0.0
        %692 = vmatprep.subr.mxu0 0.0
        %693 = vmatpush1.msra.mxu0 0.0
        %694 = vmatprep.subr.mxu0 0.0
        %695 = vmatpush1.msra.mxu0 0.0
        %696 = vmatprep.subr.mxu0 0.0
        %697 = vmatpush1.msra.mxu0 0.0
        %698 = vmatprep.subr.mxu0 0.0
        %699 = vmatpush1.msra.mxu0 0.0
        %700 = vmatprep.mubr.f32.mxu0 0.0
        %701 = vmatmul.mubr.f32.gmra.mrb[0].mxu0 %v625
        %v702 = vpop.f32.mrb[0].mxu0
        %v703 = vadd.f32 %v606, %v702
        %v704 = vpop.f32.mrb[0].mxu0
        %705 = vmatprep.mubr.f32.mxu0 0.0
        %706 = vmatmul.mubr.f32.gmra.mrb[0].mxu0 %v628
        %v707 = vpop.f32.mrb[0].mxu0
        %v708 = vadd.f32 %v611, %v707
        %v709 = vpop.f32.mrb[0].mxu0
        %710 = vmatprep.mubr.f32.mxu0 0.0
        %711 = vmatmul.mubr.f32.gmra.mrb[0].mxu0 %v631
        %v712 = vpop.f32.mrb[0].mxu0
        %v713 = vadd.f32 %v616, %v712
        %v714 = vpop.f32.mrb[0].mxu0
        %715 = vmatprep.mubr.f32.mxu0 0.0
        %716 = vmatmul.mubr.f32.gmra.mrb[0].mxu0 %v634
        %v717 = vpop.f32.mrb[0].mxu0
        %v718 = vadd.f32 %v621, %v717
        %v719 = vpop.f32.mrb[0].mxu0
        %720 = vdwg.mxu0
        %v721 = vmax.f32 %v703, 0.0
        %v722 = vmax.f32 %v708, 0.0
        %v723 = vmax.f32 %v713, 0.0
        %v724 = vmax.f32 %v718, 0.0
        %v725 = vld [vmem:[%s5] sm:$0xff]
        %v726 = vld [vmem:[%s5 + $0x8] sm:$0xff]
        %v727 = vld [vmem:[%s5 + $0x10] sm:$0xff]
        %v728 = vld [vmem:[%s5 + $0x18] sm:$0xff]
        %v729 = vld [vmem:[%s6] sm:$0xff]
        %v730 = vld [vmem:[%s6 + $0x8] sm:$0xff]
        %v731 = vld [vmem:[%s6 + $0x10] sm:$0xff]
        %v732 = vld [vmem:[%s6 + $0x18] sm:$0xff]
        %734 = vset.pattern.permute.xlu0 0
        %735 = vperm.xlu0 %734, %v729
        %v736 = vpop.permute.xlu0 %735
        %739 = vset.pattern.permute.xlu0 0
        %740 = vperm.xlu0 %739, %v730
        %v741 = vpop.permute.xlu0 %740
        %744 = vset.pattern.permute.xlu0 0
        %745 = vperm.xlu0 %744, %v731
        %v746 = vpop.permute.xlu0 %745
        %749 = vset.pattern.permute.xlu0 0
        %750 = vperm.xlu0 %749, %v732
        %v751 = vpop.permute.xlu0 %750
        %vm753 = vcmask 15360
        %v755 = vsel %vm753, %v725, 0
        %v758 = vsel %vm753, %v726, 0
        %v761 = vsel %vm753, %v727, 0
        %v764 = vsel %vm753, %v728, 0
        %v766 = vsel %vm463, %v437, 0
        %768 = vmatprep.subr.mxu0 0.0
        %769 = vmatpush1.msra.mxu0 %v766
        %770 = vmatprep.subr.mxu0 0.0
        %771 = vmatpush1.msra.mxu0 0.0
        %772 = vmatprep.subr.mxu0 0.0
        %773 = vmatpush1.msra.mxu0 0.0
        %774 = vmatprep.subr.mxu0 0.0
        %775 = vmatpush1.msra.mxu0 0.0
        %776 = vmatprep.subr.mxu0 0.0
        %777 = vmatpush1.msra.mxu0 0.0
        %778 = vmatprep.subr.mxu0 0.0
        %779 = vmatpush1.msra.mxu0 0.0
        %780 = vmatprep.subr.mxu0 0.0
        %781 = vmatpush1.msra.mxu0 0.0
        %782 = vmatprep.subr.mxu0 0.0
        %783 = vmatpush1.msra.mxu0 0.0
        %784 = vmatprep.subr.mxu0 0.0
        %785 = vmatpush1.msra.mxu0 0.0
        %786 = vmatprep.subr.mxu0 0.0
        %787 = vmatpush1.msra.mxu0 0.0
        %788 = vmatprep.subr.mxu0 0.0
        %789 = vmatpush1.msra.mxu0 0.0
        %790 = vmatprep.subr.mxu0 0.0
        %791 = vmatpush1.msra.mxu0 0.0
        %792 = vmatprep.subr.mxu0 0.0
        %793 = vmatpush1.msra.mxu0 0.0
        %794 = vmatprep.subr.mxu0 0.0
        %795 = vmatpush1.msra.mxu0 0.0
        %796 = vmatprep.subr.mxu0 0.0
        %797 = vmatpush1.msra.mxu0 0.0
        %798 = vmatprep.subr.mxu0 0.0
        %799 = vmatpush1.msra.mxu0 0.0
        %800 = vmatprep.subr.mxu0 0.0
        %801 = vmatpush1.msra.mxu0 0.0
        %802 = vmatprep.subr.mxu0 0.0
        %803 = vmatpush1.msra.mxu0 0.0
        %804 = vmatprep.subr.mxu0 0.0
        %805 = vmatpush1.msra.mxu0 0.0
        %806 = vmatprep.subr.mxu0 0.0
        %807 = vmatpush1.msra.mxu0 0.0
        %808 = vmatprep.subr.mxu0 0.0
        %809 = vmatpush1.msra.mxu0 0.0
        %810 = vmatprep.subr.mxu0 0.0
        %811 = vmatpush1.msra.mxu0 0.0
        %812 = vmatprep.subr.mxu0 0.0
        %813 = vmatpush1.msra.mxu0 0.0
        %814 = vmatprep.subr.mxu0 0.0
        %815 = vmatpush1.msra.mxu0 0.0
        %816 = vmatprep.subr.mxu0 0.0
        %817 = vmatpush1.msra.mxu0 0.0
        %818 = vmatprep.subr.mxu0 0.0
        %819 = vmatpush1.msra.mxu0 0.0
        %820 = vmatprep.subr.mxu0 0.0
        %821 = vmatpush1.msra.mxu0 0.0
        %822 = vmatprep.subr.mxu0 0.0
        %823 = vmatpush1.msra.mxu0 0.0
        %824 = vmatprep.subr.mxu0 0.0
        %825 = vmatpush1.msra.mxu0 0.0
        %826 = vmatprep.subr.mxu0 0.0
        %827 = vmatpush1.msra.mxu0 0.0
        %828 = vmatprep.subr.mxu0 0.0
        %829 = vmatpush1.msra.mxu0 0.0
        %830 = vmatprep.subr.mxu0 0.0
        %831 = vmatpush1.msra.mxu0 0.0
        %832 = vmatprep.mubr.f32.mxu0 0.0
        %833 = vmatmul.mubr.f32.gmra.mrb[0].mxu0 %v755
        %v834 = vpop.f32.mrb[0].mxu0
        %v835 = vadd.f32 %v736, %v834
        %v836 = vpop.f32.mrb[0].mxu0
        %837 = vmatprep.mubr.f32.mxu0 0.0
        %838 = vmatmul.mubr.f32.gmra.mrb[0].mxu0 %v758
        %v839 = vpop.f32.mrb[0].mxu0
        %v840 = vadd.f32 %v741, %v839
        %v841 = vpop.f32.mrb[0].mxu0
        %842 = vmatprep.mubr.f32.mxu0 0.0
        %843 = vmatmul.mubr.f32.gmra.mrb[0].mxu0 %v761
        %v844 = vpop.f32.mrb[0].mxu0
        %v845 = vadd.f32 %v746, %v844
        %v846 = vpop.f32.mrb[0].mxu0
        %847 = vmatprep.mubr.f32.mxu0 0.0
        %848 = vmatmul.mubr.f32.gmra.mrb[0].mxu0 %v764
        %v849 = vpop.f32.mrb[0].mxu0
        %v850 = vadd.f32 %v751, %v849
        %v851 = vpop.f32.mrb[0].mxu0
        %852 = vdwg.mxu0
        %v853 = vadd.f32 %v721, %v835
        %v854 = vadd.f32 %v722, %v840
        %v855 = vadd.f32 %v723, %v845
        %v856 = vadd.f32 %v724, %v850
        %v857 = vmax.f32 %v853, 0.0
        %v858 = vmax.f32 %v854, 0.0
        %v859 = vmax.f32 %v855, 0.0
        %v860 = vmax.f32 %v856, 0.0
        %v861 = vld [vmem:[%s7] sm:$0xff]
        %v862 = vld [vmem:[%s7 + $0x8] sm:$0xff]
        %v863 = vld [vmem:[%s7 + $0x10] sm:$0xff]
        %v864 = vld [vmem:[%s7 + $0x18] sm:$0xff]
        %v865 = vld [vmem:[%s8] sm:$0xff]
        %v866 = vld [vmem:[%s8 + $0x8] sm:$0xff]
        %v867 = vld [vmem:[%s8 + $0x10] sm:$0xff]
        %v868 = vld [vmem:[%s8 + $0x18] sm:$0xff]
        %v869 = vld [vmem:[%s9] sm:$0xff]
        %v870 = vld [vmem:[%s9 + $0x8] sm:$0xff]
        %v871 = vld [vmem:[%s9 + $0x10] sm:$0xff]
        %v872 = vld [vmem:[%s9 + $0x18] sm:$0xff]
        %v873 = vld [vmem:[%s10] sm:$0xff]
        %v874 = vld [vmem:[%s10 + $0x8] sm:$0xff]
        %v875 = vld [vmem:[%s10 + $0x10] sm:$0xff]
        %v876 = vld [vmem:[%s10 + $0x18] sm:$0xff]
        %877 = vrot.lane.b32.xlu0 %v857, 2
        %v878 = vpop.permute.xlu0 %877
        %879 = vrot.lane.b32.xlu0 %v858, 2
        %v880 = vpop.permute.xlu0 %879
        %881 = vrot.lane.b32.xlu0 %v859, 2
        %v882 = vpop.permute.xlu0 %881
        %883 = vrot.lane.b32.xlu0 %v860, 2
        %v884 = vpop.permute.xlu0 %883
        %vm885 = vcmp.ge.s32.totalorder %v457, 2
        %v886 = vsel %vm885, %v878, 0.0
        %v887 = vsel %vm885, %v880, 0.0
        %v888 = vsel %vm885, %v882, 0.0
        %v889 = vsel %vm885, %v884, 0.0
        %891 = vset.pattern.permute.xlu0 0
        %892 = vperm.xlu0 %891, %v865
        %v893 = vpop.permute.xlu0 %892
        %896 = vset.pattern.permute.xlu0 0
        %897 = vperm.xlu0 %896, %v866
        %v898 = vpop.permute.xlu0 %897
        %901 = vset.pattern.permute.xlu0 0
        %902 = vperm.xlu0 %901, %v867
        %v903 = vpop.permute.xlu0 %902
        %906 = vset.pattern.permute.xlu0 0
        %907 = vperm.xlu0 %906, %v868
        %v908 = vpop.permute.xlu0 %907
        %v911 = vsel %vm623, %v861, 0
        %v914 = vsel %vm623, %v862, 0
        %v917 = vsel %vm623, %v863, 0
        %v920 = vsel %vm623, %v864, 0
        %922 = vmatprep.subr.mxu0 0.0
        %923 = vmatpush1.msra.mxu0 %v886
        %924 = vmatprep.subr.mxu0 0.0
        %925 = vmatpush1.msra.mxu0 %v887
        %926 = vmatprep.subr.mxu0 0.0
        %927 = vmatpush1.msra.mxu0 %v888
        %928 = vmatprep.subr.mxu0 0.0
        %929 = vmatpush1.msra.mxu0 %v889
        %930 = vmatprep.subr.mxu0 0.0
        %931 = vmatpush1.msra.mxu0 %v857
        %932 = vmatprep.subr.mxu0 0.0
        %933 = vmatpush1.msra.mxu0 %v858
        %934 = vmatprep.subr.mxu0 0.0
        %935 = vmatpush1.msra.mxu0 %v859
        %936 = vmatprep.subr.mxu0 0.0
        %937 = vmatpush1.msra.mxu0 %v860
        %938 = vmatprep.subr.mxu0 0.0
        %939 = vmatpush1.msra.mxu0 0.0
        %940 = vmatprep.subr.mxu0 0.0
        %941 = vmatpush1.msra.mxu0 0.0
        %942 = vmatprep.subr.mxu0 0.0
        %943 = vmatpush1.msra.mxu0 0.0
        %944 = vmatprep.subr.mxu0 0.0
        %945 = vmatpush1.msra.mxu0 0.0
        %946 = vmatprep.subr.mxu0 0.0
        %947 = vmatpush1.msra.mxu0 0.0
        %948 = vmatprep.subr.mxu0 0.0
        %949 = vmatpush1.msra.mxu0 0.0
        %950 = vmatprep.subr.mxu0 0.0
        %951 = vmatpush1.msra.mxu0 0.0
        %952 = vmatprep.subr.mxu0 0.0
        %953 = vmatpush1.msra.mxu0 0.0
        %954 = vmatprep.subr.mxu0 0.0
        %955 = vmatpush1.msra.mxu0 0.0
        %956 = vmatprep.subr.mxu0 0.0
        %957 = vmatpush1.msra.mxu0 0.0
        %958 = vmatprep.subr.mxu0 0.0
        %959 = vmatpush1.msra.mxu0 0.0
        %960 = vmatprep.subr.mxu0 0.0
        %961 = vmatpush1.msra.mxu0 0.0
        %962 = vmatprep.subr.mxu0 0.0
        %963 = vmatpush1.msra.mxu0 0.0
        %964 = vmatprep.subr.mxu0 0.0
        %965 = vmatpush1.msra.mxu0 0.0
        %966 = vmatprep.subr.mxu0 0.0
        %967 = vmatpush1.msra.mxu0 0.0
        %968 = vmatprep.subr.mxu0 0.0
        %969 = vmatpush1.msra.mxu0 0.0
        %970 = vmatprep.subr.mxu0 0.0
        %971 = vmatpush1.msra.mxu0 0.0
        %972 = vmatprep.subr.mxu0 0.0
        %973 = vmatpush1.msra.mxu0 0.0
        %974 = vmatprep.subr.mxu0 0.0
        %975 = vmatpush1.msra.mxu0 0.0
        %976 = vmatprep.subr.mxu0 0.0
        %977 = vmatpush1.msra.mxu0 0.0
        %978 = vmatprep.subr.mxu0 0.0
        %979 = vmatpush1.msra.mxu0 0.0
        %980 = vmatprep.subr.mxu0 0.0
        %981 = vmatpush1.msra.mxu0 0.0
        %982 = vmatprep.subr.mxu0 0.0
        %983 = vmatpush1.msra.mxu0 0.0
        %984 = vmatprep.subr.mxu0 0.0
        %985 = vmatpush1.msra.mxu0 0.0
        %986 = vmatprep.mubr.f32.mxu0 0.0
        %987 = vmatmul.mubr.f32.gmra.mrb[0].mxu0 %v911
        %v988 = vpop.f32.mrb[0].mxu0
        %v989 = vadd.f32 %v893, %v988
        %v990 = vpop.f32.mrb[0].mxu0
        %991 = vmatprep.mubr.f32.mxu0 0.0
        %992 = vmatmul.mubr.f32.gmra.mrb[0].mxu0 %v914
        %v993 = vpop.f32.mrb[0].mxu0
        %v994 = vadd.f32 %v898, %v993
        %v995 = vpop.f32.mrb[0].mxu0
        %996 = vmatprep.mubr.f32.mxu0 0.0
        %997 = vmatmul.mubr.f32.gmra.mrb[0].mxu0 %v917
        %v998 = vpop.f32.mrb[0].mxu0
        %v999 = vadd.f32 %v903, %v998
        %v1000 = vpop.f32.mrb[0].mxu0
        %1001 = vmatprep.mubr.f32.mxu0 0.0
        %1002 = vmatmul.mubr.f32.gmra.mrb[0].mxu0 %v920
        %v1003 = vpop.f32.mrb[0].mxu0
        %v1004 = vadd.f32 %v908, %v1003
        %v1005 = vpop.f32.mrb[0].mxu0
        %1006 = vdwg.mxu0
        %v1007 = vmax.f32 %v989, 0.0
        %v1008 = vmax.f32 %v994, 0.0
        %v1009 = vmax.f32 %v999, 0.0
        %v1010 = vmax.f32 %v1004, 0.0
        %1011 = vrot.lane.b32.xlu0 %v1007, 2
        %v1012 = vpop.permute.xlu0 %1011
        %1013 = vrot.lane.b32.xlu0 %v1008, 2
        %v1014 = vpop.permute.xlu0 %1013
        %1015 = vrot.lane.b32.xlu0 %v1009, 2
        %v1016 = vpop.permute.xlu0 %1015
        %1017 = vrot.lane.b32.xlu0 %v1010, 2
        %v1018 = vpop.permute.xlu0 %1017
        %v1019 = vsel %vm885, %v1012, 0.0
        %v1020 = vsel %vm885, %v1014, 0.0
        %v1021 = vsel %vm885, %v1016, 0.0
        %v1022 = vsel %vm885, %v1018, 0.0
        %1024 = vset.pattern.permute.xlu0 0
        %1025 = vperm.xlu0 %1024, %v873
        %v1026 = vpop.permute.xlu0 %1025
        %1029 = vset.pattern.permute.xlu0 0
        %1030 = vperm.xlu0 %1029, %v874
        %v1031 = vpop.permute.xlu0 %1030
        %1034 = vset.pattern.permute.xlu0 0
        %1035 = vperm.xlu0 %1034, %v875
        %v1036 = vpop.permute.xlu0 %1035
        %1039 = vset.pattern.permute.xlu0 0
        %1040 = vperm.xlu0 %1039, %v876
        %v1041 = vpop.permute.xlu0 %1040
        %v1044 = vsel %vm623, %v869, 0
        %v1047 = vsel %vm623, %v870, 0
        %v1050 = vsel %vm623, %v871, 0
        %v1053 = vsel %vm623, %v872, 0
        %1055 = vmatprep.subr.mxu0 0.0
        %1056 = vmatpush1.msra.mxu0 %v1019
        %1057 = vmatprep.subr.mxu0 0.0
        %1058 = vmatpush1.msra.mxu0 %v1020
        %1059 = vmatprep.subr.mxu0 0.0
        %1060 = vmatpush1.msra.mxu0 %v1021
        %1061 = vmatprep.subr.mxu0 0.0
        %1062 = vmatpush1.msra.mxu0 %v1022
        %1063 = vmatprep.subr.mxu0 0.0
        %1064 = vmatpush1.msra.mxu0 %v1007
        %1065 = vmatprep.subr.mxu0 0.0
        %1066 = vmatpush1.msra.mxu0 %v1008
        %1067 = vmatprep.subr.mxu0 0.0
        %1068 = vmatpush1.msra.mxu0 %v1009
        %1069 = vmatprep.subr.mxu0 0.0
        %1070 = vmatpush1.msra.mxu0 %v1010
        %1071 = vmatprep.subr.mxu0 0.0
        %1072 = vmatpush1.msra.mxu0 0.0
        %1073 = vmatprep.subr.mxu0 0.0
        %1074 = vmatpush1.msra.mxu0 0.0
        %1075 = vmatprep.subr.mxu0 0.0
        %1076 = vmatpush1.msra.mxu0 0.0
        %1077 = vmatprep.subr.mxu0 0.0
        %1078 = vmatpush1.msra.mxu0 0.0
        %1079 = vmatprep.subr.mxu0 0.0
        %1080 = vmatpush1.msra.mxu0 0.0
        %1081 = vmatprep.subr.mxu0 0.0
        %1082 = vmatpush1.msra.mxu0 0.0
        %1083 = vmatprep.subr.mxu0 0.0
        %1084 = vmatpush1.msra.mxu0 0.0
        %1085 = vmatprep.subr.mxu0 0.0
        %1086 = vmatpush1.msra.mxu0 0.0
        %1087 = vmatprep.subr.mxu0 0.0
        %1088 = vmatpush1.msra.mxu0 0.0
        %1089 = vmatprep.subr.mxu0 0.0
        %1090 = vmatpush1.msra.mxu0 0.0
        %1091 = vmatprep.subr.mxu0 0.0
        %1092 = vmatpush1.msra.mxu0 0.0
        %1093 = vmatprep.subr.mxu0 0.0
        %1094 = vmatpush1.msra.mxu0 0.0
        %1095 = vmatprep.subr.mxu0 0.0
        %1096 = vmatpush1.msra.mxu0 0.0
        %1097 = vmatprep.subr.mxu0 0.0
        %1098 = vmatpush1.msra.mxu0 0.0
        %1099 = vmatprep.subr.mxu0 0.0
        %1100 = vmatpush1.msra.mxu0 0.0
        %1101 = vmatprep.subr.mxu0 0.0
        %1102 = vmatpush1.msra.mxu0 0.0
        %1103 = vmatprep.subr.mxu0 0.0
        %1104 = vmatpush1.msra.mxu0 0.0
        %1105 = vmatprep.subr.mxu0 0.0
        %1106 = vmatpush1.msra.mxu0 0.0
        %1107 = vmatprep.subr.mxu0 0.0
        %1108 = vmatpush1.msra.mxu0 0.0
        %1109 = vmatprep.subr.mxu0 0.0
        %1110 = vmatpush1.msra.mxu0 0.0
        %1111 = vmatprep.subr.mxu0 0.0
        %1112 = vmatpush1.msra.mxu0 0.0
        %1113 = vmatprep.subr.mxu0 0.0
        %1114 = vmatpush1.msra.mxu0 0.0
        %1115 = vmatprep.subr.mxu0 0.0
        %1116 = vmatpush1.msra.mxu0 0.0
        %1117 = vmatprep.subr.mxu0 0.0
        %1118 = vmatpush1.msra.mxu0 0.0
        %1119 = vmatprep.mubr.f32.mxu0 0.0
        %1120 = vmatmul.mubr.f32.gmra.mrb[0].mxu0 %v1044
        %v1121 = vpop.f32.mrb[0].mxu0
        %v1122 = vadd.f32 %v1026, %v1121
        %v1123 = vpop.f32.mrb[0].mxu0
        %1124 = vmatprep.mubr.f32.mxu0 0.0
        %1125 = vmatmul.mubr.f32.gmra.mrb[0].mxu0 %v1047
        %v1126 = vpop.f32.mrb[0].mxu0
        %v1127 = vadd.f32 %v1031, %v1126
        %v1128 = vpop.f32.mrb[0].mxu0
        %1129 = vmatprep.mubr.f32.mxu0 0.0
        %1130 = vmatmul.mubr.f32.gmra.mrb[0].mxu0 %v1050
        %v1131 = vpop.f32.mrb[0].mxu0
        %v1132 = vadd.f32 %v1036, %v1131
        %v1133 = vpop.f32.mrb[0].mxu0
        %1134 = vmatprep.mubr.f32.mxu0 0.0
        %1135 = vmatmul.mubr.f32.gmra.mrb[0].mxu0 %v1053
        %v1136 = vpop.f32.mrb[0].mxu0
        %v1137 = vadd.f32 %v1041, %v1136
        %v1138 = vpop.f32.mrb[0].mxu0
        %1139 = vdwg.mxu0
        %v1140 = vmax.f32 %v1122, 0.0
        %v1141 = vmax.f32 %v1127, 0.0
        %v1142 = vmax.f32 %v1132, 0.0
        %v1143 = vmax.f32 %v1137, 0.0
        %v1144 = vadd.f32 %v1140, %v857
        %v1145 = vadd.f32 %v1141, %v858
        %v1146 = vadd.f32 %v1142, %v859
        %v1147 = vadd.f32 %v1143, %v860
        %v1148 = vmax.f32 %v1144, 0.0
        %v1149 = vmax.f32 %v1145, 0.0
        %v1150 = vmax.f32 %v1146, 0.0
        %v1151 = vmax.f32 %v1147, 0.0
        %v1152 = vld [vmem:[%s11] sm:$0xff]
        %v1153 = vld [vmem:[%s11 + $0x8] sm:$0xff]
        %v1154 = vld [vmem:[%s11 + $0x10] sm:$0xff]
        %v1155 = vld [vmem:[%s11 + $0x18] sm:$0xff]
        %v1156 = vld [vmem:[#allocation2] sm:$0x1]
        %1158 = vset.pattern.permute.xlu0 0
        %1159 = vperm.xlu0 %1158, %v1152
        %v1160 = vpop.permute.xlu0 %1159
        %1163 = vset.pattern.permute.xlu0 0
        %1164 = vperm.xlu0 %1163, %v1153
        %v1165 = vpop.permute.xlu0 %1164
        %1168 = vset.pattern.permute.xlu0 0
        %1169 = vperm.xlu0 %1168, %v1154
        %v1170 = vpop.permute.xlu0 %1169
        %1173 = vset.pattern.permute.xlu0 0
        %1174 = vperm.xlu0 %1173, %v1155
        %v1175 = vpop.permute.xlu0 %1174
        %v1177 = vmul.f32 %v1148, %v1160
        %v1178 = vmul.f32 %v1149, %v1165
        %v1179 = vmul.f32 %v1150, %v1170
        %v1180 = vmul.f32 %v1151, %v1175
        %v1181 = vadd.f32 %v1177, %v1178
        %v1182 = vadd.f32 %v1181, %v1179
        %v1183 = vadd.f32 %v1182, %v1180
        %v1184 = vrot.slane %v1183, 4
        %v1185 = vadd.f32 %v1183, %v1184
        %v1186 = vrot.slane %v1185, 2
        %v1187 = vadd.f32 %v1185, %v1186
        %v1188 = vrot.slane %v1187, 1
        %v1189 = vadd.f32 %v1187, %v1188
        %1191 = vset.pattern.permute.xlu0 0
        %1192 = vperm.xlu0 %1191, %v1156
        %v1193 = vpop.permute.xlu0 %1192
        %v1195 = vlaneseq
        %v1196 = vshrl.u32 %v1195, 7
        %v1197 = vsub.s32 0, %v1196
        %v1198 = vrot.slane %v1193, %v1197
        %v1199 = vadd.f32 %v1189, %v1198
        %1200 = vst [vmem:[%s432] sm:$0x1] %v1199
        %s1201 = sand.u32 %s315, 1
        %s1202 = scalar_lea.sflag [#allocation4], %s1201
        %s1203 = sand.u32 %s315, 1
        %s1204 = scalar_lea.vmem [#allocation3], %s1203
        // Predicated region
        $region73: #{tpu_custom_call.1} parent=71 // pred_check
          %p1205 = pneg %p325
        $region74: #{tpu_custom_call.1} parent=71 // pred_check_branch
          %1207 = sbr.rel (%p1205) target = $region76
        $region75: #{tpu_custom_call.1} parent=71 // pred_region
          %s1209 = ssub.s32 16, 16
          %1210 = vsyncadd %s1202, %s1209
          %s1211 = smul.addr %s29, 16
          %s1212 = scalar_lea.hbm %s13, %s1211
          %s1214 = sshll.u32 %s1204, 4
          %s1215 = int_to_ptr.vmem [resolvable:$true] %s1214
          %1217 = dma.vmem_to_hbm [thread:$0]  %s1215, 16, %s1212, %s1202
        $region76: #{tpu_custom_call.1} parent=71 // pred_fallthru
          _
      $region72: #{tpu_custom_call.1} parent=5 // pred_fallthru
        _
      %p1218 = scmp.le.s32.totalorder 2, %s24
      // Predicated region
      $region77: #{tpu_custom_call.1} parent=5 // pred_check
        %p1219 = pneg %p1218
      $region78: #{tpu_custom_call.1} parent=5 // pred_check_branch
        %1221 = sbr.rel (%p1219) target = $region80
      $region79: #{tpu_custom_call.1} parent=5 // pred_region
        %s1222 = ssub.s32 %s24, 2
        // Predicated region
        $region81: #{tpu_custom_call.1} parent=79 // pred_check
          %p1223 = pneg %p331
        $region82: #{tpu_custom_call.1} parent=79 // pred_check_branch
          %1225 = sbr.rel (%p1223) target = $region84
        $region83: #{tpu_custom_call.1} parent=79 // pred_region
          %s1226 = sand.u32 %s316, 1
          %s1227 = scalar_lea.sflag [#allocation4], %s1226
          %s1228 = sand.u32 %s316, 1
          %s1229 = scalar_lea.vmem [#allocation3], %s1228
          %1230 = dma.done %s1227, 16
        $region84: #{tpu_custom_call.1} parent=79 // pred_fallthru
          _
      $region80: #{tpu_custom_call.1} parent=5 // pred_fallthru
        _
    $region6: #{tpu_custom_call.1} parent=1 // loop_footer
      %s28 = sadd.s32 1, %s24
    $region7: #{tpu_custom_call.1} parent=1 // loop_footer_branch
      %23 = sbr.rel target = $region3
    $region8: #{tpu_custom_call.1} parent=1 // loop_exit
      _
    %1231 = vsyncpa [#allocation4], 1
    %s1232 = scalar_lea.sflag [#allocation4], 1
    %1233 = vsyncpa %s1232, 1

</llo_original>
